<compile_context>
chip_gen: v7x
topology: tpu7x:2x2x1
jax: 0.10.0
libtpu: 0.0.40
codegen_flags: <defaults>
</compile_context>

<pallas_src>
import jax
import jax.numpy as jnp
from jax import lax
from jax.experimental import pallas as pl
from jax.experimental.pallas import tpu as pltpu

TAU = 1.0
LABEL_LANES = 128                 # lane-dense label block; sliced to num_classes outside
COEFF_LANE = LABEL_LANES - 1      # merge_coeff rides in the last lane of the label block


def _round_up(x, m):
    return (x + m - 1) // m * m


def _pad2(x, rows, cols):
    r, c = x.shape
    return jnp.pad(x, ((0, rows - r), (0, cols - c)))


def _pick_tile_n(n):
    """Largest multiple-of-8 divisor of n that leaves >=2 grid steps (so the
    'parallel' axis can shard across v7x's two TensorCores) and <=256 rows."""
    if n < 16 or n % 8 != 0:
        return n
    cap = min(256, n // 2)
    cap -= cap % 8
    t = max(cap, 8)
    while n % t:
        t -= 8
    return max(t, 8)


def feature_augmentation_forward(features, memory_features, labels, memory_labels,
                                 merge_coeff, wq, bq, wk, bk, *,
                                 mixup_label=True, num_classes=2,
                                 tile_n=None, mxu_dtype=jnp.bfloat16):
    f32 = jnp.float32
    n, h = features.shape
    m = memory_features.shape[0]
    assert num_classes <= COEFF_LANE, "num_classes must leave the coeff lane free"

    hp = _round_up(h, 128)
    mp = _round_up(m, 128)

    if tile_n is None:
        tile_n = _pick_tile_n(n)
    assert n % tile_n == 0 and (tile_n % 8 == 0 or tile_n == n)

    features = features.astype(f32)
    memory_features = memory_features.astype(f32)
    merge_coeff = jnp.asarray(merge_coeff, f32).reshape(n)

    # ---------- one-time wrapper-side precompute (hoisted out of the N grid) ----------
    # K projection is identical for every grid step: compute once, pre-transposed to
    # [H, M] so the kernel runs a native q[tn,H] @ kT[H,M] MXU matmul.
    k = memory_features @ wk.astype(f32).T + bk.astype(f32)                 # [m, h]
    kT = _pad2(k.T, hp, mp).astype(mxu_dtype)                               # [hp, mp]

    # Q projection weights, pre-transposed with 1/tau folded in.
    wq_t = _pad2(wq.astype(f32).T / TAU, hp, hp).astype(mxu_dtype)          # [hp, hp]
    bq2d = _pad2((bq.astype(f32) / TAU).reshape(1, h), 1, hp)               # [1, hp] f32

    # Memory bank: lane-padded, held in VMEM at MXU operand dtype.
    mem_feat_p = _pad2(memory_features, mp, hp).astype(mxu_dtype)           # [mp, hp]

    # Memory one-hot: built once (previously rebuilt with iota+compare per grid step).
    mem_onehot = _pad2(jax.nn.one_hot(memory_labels, LABEL_LANES, dtype=f32),
                       mp, LABEL_LANES).astype(mxu_dtype)                   # [mp, 128]

    # Per-sample label one-hot with merge_coeff packed into the last lane: a single
    # lane-dense [n,128] block replaces two separate (tile_n,1) DMA descriptors.
    lab_coeff = jax.nn.one_hot(labels, LABEL_LANES, dtype=f32)
    lab_coeff = lab_coeff.at[:, COEFF_LANE].set(merge_coeff)                # [n, 128]

    feats_p = _pad2(features, n, hp)                                        # [n, hp] f32

    # ------------------------------- kernel ------------------------------------------
    def kernel(feat_ref, labcoeff_ref, mem_feat_ref, kT_ref, mem_onehot_ref,
               wq_t_ref, bq_ref, aug_feat_ref, aug_lab_ref):
        feats = feat_ref[...]                                # [tn, hp] f32
        labcoeff = labcoeff_ref[...]                         # [tn, 128] f32
        coeff = labcoeff[:, COEFF_LANE:]                     # [tn, 1]

        # Q projection (MXU operands at mxu_dtype, f32 accumulate).
        q = jnp.dot(feats.astype(mxu_dtype), wq_t_ref[...],
                    preferred_element_type=jnp.float32) + bq_ref[...]

        # Attention logits against the hoisted, pre-transposed K.
        logits = jnp.dot(q.astype(mxu_dtype), kT_ref[...],
                         preferred_element_type=jnp.float32)                # [tn, mp]
        if mp != m:  # static branch: mask padded memory columns
            col = lax.broadcasted_iota(jnp.int32, logits.shape, 1)
            logits = jnp.where(col < m, logits, -1e30)

        # Numerically stable softmax with an exact divide (the approx reciprocal in
        # the previous version exceeded the 2e-3 tolerance and was removed).
        logits = logits - jnp.max(logits, axis=-1, keepdims=True)
        exp_l = jnp.exp(logits)
        attn = exp_l / jnp.sum(exp_l, axis=-1, keepdims=True)               # [tn, mp]

        attn_mx = attn.astype(mxu_dtype)
        augment_features = jnp.dot(attn_mx, mem_feat_ref[...],
                                   preferred_element_type=jnp.float32)      # [tn, hp]
        aug_feat_ref[...] = coeff * feats + (1.0 - coeff) * augment_features

        # mixup_label path: lane-dense 128-wide; columns >= num_classes are zero
        # (and the coeff lane is garbage) -- both sliced off in the wrapper.
        augment_labels = jnp.dot(attn_mx, mem_onehot_ref[...],
                                 preferred_element_type=jnp.float32)        # [tn, 128]
        aug_lab_ref[...] = coeff * labcoeff + (1.0 - coeff) * augment_labels

    # --------------------------- specs / cost / vmem ----------------------------------
    grid = (n // tile_n,)

    def row_spec(width):
        return pl.BlockSpec((tile_n, width), lambda i: (i, 0))

    def const_spec(rows, cols):
        # Constant block index: fetched once, revisited across the whole grid.
        # TODO(synk): on v7x mark these pipeline_mode=pl.Buffered(1) (or DMA once into
        # scratch) to drop the never-used second pipeline buffer.
        return pl.BlockSpec((rows, cols), lambda i: (0, 0))

    in_specs = [
        row_spec(hp),                     # features
        row_spec(LABEL_LANES),            # label one-hot + packed coeff
        const_spec(mp, hp),               # memory bank
        const_spec(hp, mp),               # k^T (hoisted projection)
        const_spec(mp, LABEL_LANES),      # memory one-hot
        const_spec(hp, hp),               # Wq^T (1/tau folded)
        const_spec(1, hp),                # bq
    ]
    out_specs = (row_spec(hp), row_spec(LABEL_LANES))
    out_shapes = (jax.ShapeDtypeStruct((n, hp), f32),
                  jax.ShapeDtypeStruct((n, LABEL_LANES), f32))

    itm = jnp.dtype(mxu_dtype).itemsize
    flops = 2 * n * (hp * hp + 2 * mp * hp + mp * LABEL_LANES)
    bytes_accessed = (4 * (2 * n * hp + 2 * n * LABEL_LANES + hp)
                      + itm * (mp * hp + hp * mp + mp * LABEL_LANES + hp * hp))
    cost = pl.CostEstimate(flops=flops, transcendentals=n * mp,
                           bytes_accessed=bytes_accessed)

    row_bytes = 2 * 2 * tile_n * (hp + LABEL_LANES) * 4          # double-buffered row in/out
    const_bytes = 2 * itm * (mp * hp + hp * mp + mp * LABEL_LANES + hp * hp) + 4 * hp
    live_bytes = 4 * tile_n * (hp + 2 * mp + LABEL_LANES)        # q / logits / attn / labels
    vmem_limit = int(1.5 * (row_bytes + const_bytes + live_bytes)) + (2 << 20)
    vmem_limit = min(max(vmem_limit, 16 << 20), 64 << 20)        # v7x physical VMEM = 64 MiB
    # TODO(synk): when m*hp no longer fits this budget, add a flash-style second
    # ("arbitrary") grid axis over the memory bank with online-softmax accumulators.

    aug_feat_p, aug_lab_p = pl.pallas_call(
        kernel,
        out_shape=out_shapes,
        grid=grid,
        in_specs=in_specs,
        out_specs=out_specs,
        compiler_params=pltpu.CompilerParams(
            dimension_semantics=("parallel",),
            vmem_limit_bytes=vmem_limit),
        cost_estimate=cost,
    )(feats_p, lab_coeff, mem_feat_p, kT, mem_onehot, wq_t, bq2d)

    aug_feat = aug_feat_p[:, :h]
    if not mixup_label:
        return aug_feat, labels          # mixup_label=False branch of the module
    return aug_feat, aug_lab_p[:, :num_classes]


def reference_forward(features, memory_features, labels, memory_labels,
                      merge_coeff, wq, bq, wk, bk, num_classes=2):
    q = features @ wq.T + bq
    k = memory_features @ wk.T + bk
    attn = jax.nn.softmax((q @ k.T) / TAU, axis=-1)
    augment_features = attn @ memory_features
    aug_feat = merge_coeff * features + (1.0 - merge_coeff) * augment_features
    mem_oh = jax.nn.one_hot(memory_labels, num_classes, dtype=jnp.float32)
    lab_oh = jax.nn.one_hot(labels, num_classes, dtype=jnp.float32)
    aug_lab = merge_coeff * lab_oh + (1.0 - merge_coeff) * (attn @ mem_oh)
    return aug_feat, aug_lab


if __name__ == "__main__":
    key = jax.random.PRNGKey(0)
    N, M, H = 16, 16, 32          # batch, memory size, hidden_size
    NUM_CLASSES = 2

    k_feat, k_mem, k_lab, k_mlab, k_coef, k_wq, k_bq, k_wk, k_bk = jax.random.split(key, 9)
    features = jax.random.normal(k_feat, (N, H), dtype=jnp.float32)
    memory_features = jax.random.normal(k_mem, (M, H), dtype=jnp.float32)
    labels = jax.random.randint(k_lab, (N,), 0, NUM_CLASSES, dtype=jnp.int32)
    memory_labels = jax.random.randint(k_mlab, (M,), 0, NUM_CLASSES, dtype=jnp.int32)

    # TODO(synk): np.random.beta(0.5, 0.5) sampling is done wrapper-side (deterministic
    # stand-in), not in-kernel.
    merge_coeff = jax.random.beta(k_coef, 0.5, 0.5, (N, 1)).astype(jnp.float32)

    # Deterministic nn.Linear-style parameters (uniform in [-1/sqrt(H), 1/sqrt(H)]).
    bound = 1.0 / jnp.sqrt(float(H))
    wq = jax.random.uniform(k_wq, (H, H), minval=-bound, maxval=bound, dtype=jnp.float32)
    bq = jax.random.uniform(k_bq, (H,), minval=-bound, maxval=bound, dtype=jnp.float32)
    wk = jax.random.uniform(k_wk, (H, H), minval=-bound, maxval=bound, dtype=jnp.float32)
    bk = jax.random.uniform(k_bk, (H,), minval=-bound, maxval=bound, dtype=jnp.float32)

    # Demo runs the f32 MXU path for a tight numerical check; on v6e/v7x use the
    # default mxu_dtype=jnp.bfloat16 (f32 accumulation) for MXU-peak throughput.
    aug_feat, aug_lab = feature_augmentation_forward(
        features, memory_features, labels, memory_labels, merge_coeff,
        wq, bq, wk, bk, num_classes=NUM_CLASSES, mxu_dtype=jnp.float32)
    jax.block_until_ready((aug_feat, aug_lab))

    ref_feat, ref_lab = reference_forward(
        features, memory_features, labels, memory_labels, merge_coeff,
        wq, bq, wk, bk, num_classes=NUM_CLASSES)

    assert aug_feat.shape == (N, H) and aug_lab.shape == (N, NUM_CLASSES)
    assert jnp.allclose(aug_feat, ref_feat, atol=2e-3, rtol=2e-3)
    assert jnp.allclose(aug_lab, ref_lab, atol=2e-3, rtol=2e-3)

    print("KERNEL_OK")
</pallas_src>

<mosaic_0001>
module attributes {stable_mosaic.version = 11 : i64} {
  func.func @kernel(%arg0: i32, %arg1: memref<8x128xf32, #tpu.memory_space<vmem>>, %arg2: memref<8x128xf32, #tpu.memory_space<vmem>>, %arg3: memref<128x128xf32, #tpu.memory_space<vmem>>, %arg4: memref<128x128xf32, #tpu.memory_space<vmem>>, %arg5: memref<128x128xf32, #tpu.memory_space<vmem>>, %arg6: memref<128x128xf32, #tpu.memory_space<vmem>>, %arg7: memref<1x128xf32, #tpu.memory_space<vmem>>, %arg8: memref<8x128xf32, #tpu.memory_space<vmem>>, %arg9: memref<8x128xf32, #tpu.memory_space<vmem>>) attributes {dimension_semantics = [#tpu.dimension_semantics<parallel>], iteration_bounds = array<i64: 2>, scalar_prefetch = 0 : i64, scratch_operands = 0 : i64, tpu.core_type = #tpu.core_type<tc>, window_params = [{transform_indices = @transform_0, window_bounds = array<i64: 8, 128>}, {transform_indices = @transform_1, window_bounds = array<i64: 8, 128>}, {pipeline_mode = #tpu.pipeline_mode<synchronous>, transform_indices = @transform_2, window_bounds = array<i64: 128, 128>}, {pipeline_mode = #tpu.pipeline_mode<synchronous>, transform_indices = @transform_3, window_bounds = array<i64: 128, 128>}, {pipeline_mode = #tpu.pipeline_mode<synchronous>, transform_indices = @transform_4, window_bounds = array<i64: 128, 128>}, {pipeline_mode = #tpu.pipeline_mode<synchronous>, transform_indices = @transform_5, window_bounds = array<i64: 128, 128>}, {pipeline_mode = #tpu.pipeline_mode<synchronous>, transform_indices = @transform_6, window_bounds = array<i64: 1, 128>}, {transform_indices = @transform_7, window_bounds = array<i64: 8, 128>}, {transform_indices = @transform_8, window_bounds = array<i64: 8, 128>}]} {
    %c0 = arith.constant 0 : index
    %c0_0 = arith.constant 0 : index
    %0 = vector.load %arg1[%c0, %c0_0] : memref<8x128xf32, #tpu.memory_space<vmem>>, vector<8x128xf32>
    %c0_1 = arith.constant 0 : index
    %c0_2 = arith.constant 0 : index
    %1 = vector.load %arg2[%c0_1, %c0_2] : memref<8x128xf32, #tpu.memory_space<vmem>>, vector<8x128xf32>
    %2 = vector.extract_strided_slice %1 {offsets = [0, 127], sizes = [8, 1], strides = [1, 1]} : vector<8x128xf32> to vector<8x1xf32>
    %c0_3 = arith.constant 0 : index
    %c0_4 = arith.constant 0 : index
    %3 = vector.load %arg6[%c0_3, %c0_4] : memref<128x128xf32, #tpu.memory_space<vmem>>, vector<128x128xf32>
    %cst = arith.constant dense<0.000000e+00> : vector<8x128xf32>
    %4 = tpu.matmul %0, %3, %cst {dimension_numbers = #tpu.dot_dimension_numbers<[1], [0], [0], [1], [0, 0, 1, 1], [], []>} : vector<8x128xf32>, vector<128x128xf32>, vector<8x128xf32> -> vector<8x128xf32>
    %c0_5 = arith.constant 0 : index
    %c0_6 = arith.constant 0 : index
    %5 = vector.load %arg7[%c0_5, %c0_6] : memref<1x128xf32, #tpu.memory_space<vmem>>, vector<1x128xf32>
    %6 = vector.broadcast %5 : vector<1x128xf32> to vector<8x128xf32>
    %7 = arith.addf %4, %6 : vector<8x128xf32>
    %c0_7 = arith.constant 0 : index
    %c0_8 = arith.constant 0 : index
    %8 = vector.load %arg4[%c0_7, %c0_8] : memref<128x128xf32, #tpu.memory_space<vmem>>, vector<128x128xf32>
    %cst_9 = arith.constant dense<0.000000e+00> : vector<8x128xf32>
    %9 = tpu.matmul %7, %8, %cst_9 {dimension_numbers = #tpu.dot_dimension_numbers<[1], [0], [0], [1], [0, 0, 1, 1], [], []>} : vector<8x128xf32>, vector<128x128xf32>, vector<8x128xf32> -> vector<8x128xf32>
    %10 = tpu.iota {dimensions = array<i32: 1>} : vector<8x128xi32>
    %c16_i32 = arith.constant 16 : i32
    %11 = vector.broadcast %c16_i32 : i32 to vector<8x128xi32>
    %12 = arith.cmpi slt, %10, %11 : vector<8x128xi32>
    %cst_10 = arith.constant -1.000000e+30 : f32
    %13 = vector.broadcast %cst_10 : f32 to vector<8x128xf32>
    %14 = arith.select %12, %9, %13 : vector<8x128xi1>, vector<8x128xf32>
    %cst_11 = arith.constant dense<0xFF800000> : vector<8xf32>
    %15 = vector.multi_reduction <maximumf>, %14, %cst_11 [1] : vector<8x128xf32> to vector<8xf32>
    %16 = vector.shape_cast %15 : vector<8xf32> to vector<8x1xf32>
    %17 = vector.broadcast %16 : vector<8x1xf32> to vector<8x128xf32>
    %18 = arith.subf %14, %17 : vector<8x128xf32>
    %19 = math.exp %18 : vector<8x128xf32>
    %cst_12 = arith.constant dense<0.000000e+00> : vector<8xf32>
    %20 = vector.multi_reduction <add>, %19, %cst_12 [1] : vector<8x128xf32> to vector<8xf32>
    %21 = vector.shape_cast %20 : vector<8xf32> to vector<8x1xf32>
    %22 = vector.broadcast %21 : vector<8x1xf32> to vector<8x128xf32>
    %23 = arith.divf %19, %22 : vector<8x128xf32>
    %c0_13 = arith.constant 0 : index
    %c0_14 = arith.constant 0 : index
    %24 = vector.load %arg3[%c0_13, %c0_14] : memref<128x128xf32, #tpu.memory_space<vmem>>, vector<128x128xf32>
    %cst_15 = arith.constant dense<0.000000e+00> : vector<8x128xf32>
    %25 = tpu.matmul %23, %24, %cst_15 {dimension_numbers = #tpu.dot_dimension_numbers<[1], [0], [0], [1], [0, 0, 1, 1], [], []>} : vector<8x128xf32>, vector<128x128xf32>, vector<8x128xf32> -> vector<8x128xf32>
    %26 = vector.broadcast %2 : vector<8x1xf32> to vector<8x128xf32>
    %27 = arith.mulf %26, %0 : vector<8x128xf32>
    %cst_16 = arith.constant 1.000000e+00 : f32
    %28 = vector.broadcast %cst_16 : f32 to vector<8x1xf32>
    %29 = arith.subf %28, %2 : vector<8x1xf32>
    %30 = vector.broadcast %29 : vector<8x1xf32> to vector<8x128xf32>
    %31 = arith.mulf %30, %25 : vector<8x128xf32>
    %32 = arith.addf %27, %31 : vector<8x128xf32>
    %c0_17 = arith.constant 0 : index
    %c0_18 = arith.constant 0 : index
    %33 = vector.load %arg8[%c0_17, %c0_18] : memref<8x128xf32, #tpu.memory_space<vmem>>, vector<8x128xf32>
    tpu.vector_store %arg8[%c0_17, %c0_18], %32 {strides = array<i32>} : memref<8x128xf32, #tpu.memory_space<vmem>>, vector<8x128xf32>,
    %c0_19 = arith.constant 0 : index
    %c0_20 = arith.constant 0 : index
    %34 = vector.load %arg5[%c0_19, %c0_20] : memref<128x128xf32, #tpu.memory_space<vmem>>, vector<128x128xf32>
    %cst_21 = arith.constant dense<0.000000e+00> : vector<8x128xf32>
    %35 = tpu.matmul %23, %34, %cst_21 {dimension_numbers = #tpu.dot_dimension_numbers<[1], [0], [0], [1], [0, 0, 1, 1], [], []>} : vector<8x128xf32>, vector<128x128xf32>, vector<8x128xf32> -> vector<8x128xf32>
    %36 = vector.broadcast %2 : vector<8x1xf32> to vector<8x128xf32>
    %37 = arith.mulf %36, %1 : vector<8x128xf32>
    %cst_22 = arith.constant 1.000000e+00 : f32
    %38 = vector.broadcast %cst_22 : f32 to vector<8x1xf32>
    %39 = arith.subf %38, %2 : vector<8x1xf32>
    %40 = vector.broadcast %39 : vector<8x1xf32> to vector<8x128xf32>
    %41 = arith.mulf %40, %35 : vector<8x128xf32>
    %42 = arith.addf %37, %41 : vector<8x128xf32>
    %c0_23 = arith.constant 0 : index
    %c0_24 = arith.constant 0 : index
    %43 = vector.load %arg9[%c0_23, %c0_24] : memref<8x128xf32, #tpu.memory_space<vmem>>, vector<8x128xf32>
    tpu.vector_store %arg9[%c0_23, %c0_24], %42 {strides = array<i32>} : memref<8x128xf32, #tpu.memory_space<vmem>>, vector<8x128xf32>,
    return
  }
  func.func @transform_0(%arg0: i32) -> (i32, i32) {
    %c0_i32 = arith.constant 0 : i32
    %c0_i32_0 = arith.constant 0 : i32
    return %arg0, %c0_i32 : i32, i32
  }
  func.func @transform_1(%arg0: i32) -> (i32, i32) {
    %c0_i32 = arith.constant 0 : i32
    %c0_i32_0 = arith.constant 0 : i32
    return %arg0, %c0_i32 : i32, i32
  }
  func.func @transform_2(%arg0: i32) -> (i32, i32) {
    %c0_i32 = arith.constant 0 : i32
    %c0_i32_0 = arith.constant 0 : i32
    %c0_i32_1 = arith.constant 0 : i32
    return %c0_i32, %c0_i32_0 : i32, i32
  }
  func.func @transform_3(%arg0: i32) -> (i32, i32) {
    %c0_i32 = arith.constant 0 : i32
    %c0_i32_0 = arith.constant 0 : i32
    %c0_i32_1 = arith.constant 0 : i32
    return %c0_i32, %c0_i32_0 : i32, i32
  }
  func.func @transform_4(%arg0: i32) -> (i32, i32) {
    %c0_i32 = arith.constant 0 : i32
    %c0_i32_0 = arith.constant 0 : i32
    %c0_i32_1 = arith.constant 0 : i32
    return %c0_i32, %c0_i32_0 : i32, i32
  }
  func.func @transform_5(%arg0: i32) -> (i32, i32) {
    %c0_i32 = arith.constant 0 : i32
    %c0_i32_0 = arith.constant 0 : i32
    %c0_i32_1 = arith.constant 0 : i32
    return %c0_i32, %c0_i32_0 : i32, i32
  }
  func.func @transform_6(%arg0: i32) -> (i32, i32) {
    %c0_i32 = arith.constant 0 : i32
    %c0_i32_0 = arith.constant 0 : i32
    %c0_i32_1 = arith.constant 0 : i32
    return %c0_i32, %c0_i32_0 : i32, i32
  }
  func.func @transform_7(%arg0: i32) -> (i32, i32) {
    %c0_i32 = arith.constant 0 : i32
    %c0_i32_0 = arith.constant 0 : i32
    return %arg0, %c0_i32 : i32, i32
  }
  func.func @transform_8(%arg0: i32) -> (i32, i32) {
    %c0_i32 = arith.constant 0 : i32
    %c0_i32_0 = arith.constant 0 : i32
    return %arg0, %c0_i32 : i32, i32
  }
}

</mosaic_0001>

<llo_original>
// kernel: tpu_custom_call.1
$region0: #{tpu_custom_call.1}
  #allocation0 [shape = 'u32[]', space=smem, size = 0x4, offset = 0x4, fixed_abs, tag = 'smem constant byte address 0x4 - core index']
  #allocation1 [shape = 'u32[144,128]{1,0:T(1,128)}', space=vmem, size = 0x12000, scoped, tag = 'internal scratch']
  %s0 = inlined_call_operand.hbm [shape: f32[16,128], index: 0, kind: input, shape index: {}]
  %s1 = inlined_call_operand.hbm [shape: f32[16,128], index: 1, kind: input, shape index: {}]
  %s2 = inlined_call_operand.hbm [shape: f32[128,128], index: 2, kind: input, shape index: {}]
  %s3 = inlined_call_operand.hbm [shape: f32[128,128], index: 3, kind: input, shape index: {}]
  %s4 = inlined_call_operand.hbm [shape: f32[128,128], index: 4, kind: input, shape index: {}]
  %s5 = inlined_call_operand.hbm [shape: f32[128,128], index: 5, kind: input, shape index: {}]
  %s6 = inlined_call_operand.vmem [shape: f32[1,128], index: 6, kind: input, shape index: {}]
  %s7 = inlined_call_operand.hbm [shape: f32[16,128], index: 7, kind: output, shape index: {0}]
  %s8 = inlined_call_operand.hbm [shape: f32[16,128], index: 8, kind: output, shape index: {1}]
  %9 = xla_tuple %s7, %s8
  %s10 = sld [smem:[#allocation0]]
  $region93: #{tpu_custom_call.1} parent=0
    _
  %s12 = ssub.s32 1, %s10
  %s13 = scalar_select 0, %s12, %s10
  $region1: #{tpu_custom_call.1} parent=0
    #allocation2 [shape = 'u8[8192]{0}', space=vmem, size = 0x2000, scoped, tag = 'input window, operand 0']
    #allocation3 [shape = 's32[2]{0}', space=sflag, size = 0x8, scoped, tag = 'scoped memory for tpu_custom_call.1']
    #allocation4 [shape = 's32[2]{0}', space=sflag, size = 0x8, scoped, tag = 'scoped memory for tpu_custom_call.1']
    #allocation5 [shape = 'u8[8192]{0}', space=vmem, size = 0x2000, scoped, tag = 'input window, operand 1']
    #allocation6 [shape = 's32[2]{0}', space=sflag, size = 0x8, scoped, tag = 'scoped memory for tpu_custom_call.1']
    #allocation7 [shape = 'u8[65536]{0}', space=vmem, size = 0x10000, scoped, tag = 'input window, operand 2, single buffered']
    #allocation8 [shape = 'u8[65536]{0}', space=vmem, size = 0x10000, scoped, tag = 'input window, operand 3, single buffered']
    #allocation9 [shape = 's32[1]{0}', space=sflag, size = 0x4, scoped, tag = 'scoped memory for tpu_custom_call.1']
    #allocation10 [shape = 'u8[65536]{0}', space=vmem, size = 0x10000, scoped, tag = 'input window, operand 4, single buffered']
    #allocation11 [shape = 'u8[65536]{0}', space=vmem, size = 0x10000, scoped, tag = 'input window, operand 5, single buffered']
    #allocation12 [shape = 's32[1]{0}', space=sflag, size = 0x4, scoped, tag = 'scoped memory for tpu_custom_call.1']
    #allocation13 [shape = 'u8[8192]{0}', space=vmem, size = 0x2000, scoped, tag = 'output window, operand 0']
    #allocation14 [shape = 'u8[8192]{0}', space=vmem, size = 0x2000, scoped, tag = 'output window, operand 1']
    #allocation15 [shape = 's32[2]{0}', space=sflag, size = 0x8, scoped, tag = 'scoped memory for tpu_custom_call.1']
    %14 = vsyncpa [#allocation3], 0
    %s15 = scalar_lea.sflag [#allocation3], 1
    %16 = vsyncpa %s15, 0
    %17 = vsyncpa [#allocation6], 0
    %s18 = scalar_lea.sflag [#allocation6], 1
    %19 = vsyncpa %s18, 0
    %20 = vsyncpa [#allocation9], 0
    %21 = vsyncpa [#allocation12], 0
    %22 = vsyncpa [#allocation4], 0
    %s23 = scalar_lea.sflag [#allocation4], 1
    %24 = vsyncpa %s23, 0
    %25 = vsyncpa [#allocation15], 0
    %s26 = scalar_lea.sflag [#allocation15], 1
    %27 = vsyncpa %s26, 0
    loop: start=0, step=1, limit=4
    $region2: #{tpu_custom_call.1} parent=1 // loop_pre_header
      _
    $region3: #{tpu_custom_call.1} parent=1 // loop_header
      %s29 = sphi 0, %s33
      %p30 = scmp.ge.s32.totalorder %s29, 4
      %s39 = sphi 0, %s41
      %s42 = sphi 0, %s39
      %s43 = sphi 0, %s42
      %s59 = sphi 0, %s43
      %s65 = sphi 0, %s67
      %s68 = sphi 0, %s65
      %s69 = sphi 0, %s68
      %s85 = sphi 0, %s69
      %s89 = sphi 0, %s89
      %s91 = sphi 0, %s89
      %s92 = sphi 0, %s91
      %s106 = sphi 0, %s92
      %s110 = sphi 0, %s110
      %s112 = sphi 0, %s110
      %s113 = sphi 0, %s112
      %s127 = sphi 0, %s113
      %s131 = sphi 0, %s131
      %s133 = sphi 0, %s131
      %s134 = sphi 0, %s133
      %s148 = sphi 0, %s134
      %s152 = sphi 0, %s152
      %s154 = sphi 0, %s152
      %s155 = sphi 0, %s154
      %s169 = sphi 0, %s155
      %s173 = sphi 0, %s173
      %s175 = sphi 0, %s173
      %s176 = sphi 0, %s175
      %s190 = sphi 0, %s176
      %s196 = sphi 0, %s198
      %s199 = sphi 0, %s196
      %s200 = sphi 0, %s199
      %s216 = sphi 0, %s200
      %s222 = sphi 0, %s224
      %s225 = sphi 0, %s222
      %s226 = sphi 0, %s225
      %s242 = sphi 0, %s226
    $region4: #{tpu_custom_call.1} parent=1 // loop_header_branch
      %32 = sbr.rel (%p30) target = $region8
    $region5: #{tpu_custom_call.1} parent=1 // loop_body
      %s34 = ssub.s32 %s29, 1
      %s35 = ssub.s32 %s29, 2
      %s36 = sadd.s32 %s29, 1
      %s37 = ssub.s32 %s29, %s36
      %p38 = scmp.eq.s32.totalorder %s37, 0
      %s40 = sadd.s32 %s39, 1
      %s41 = scalar_select %p38, %s39, %s40
      %p44 = pneg %p38
      %p45 = scmp.eq.s32.totalorder %s29, 1
      %p46 = por %p44, %p45
      %p47 = scmp.ne.s32.totalorder %s39, %s42
      %p48 = scmp.eq.s32.totalorder %s29, 0
      %p49 = por %p47, %p48
      %p50 = scmp.ne.s32.totalorder %s39, %s42
      %p51 = scmp.eq.s32.totalorder %s34, 1
      %p52 = por %p50, %p51
      %p53 = scmp.ne.s32.totalorder %s42, %s43
      %p54 = scmp.eq.s32.totalorder %s34, 0
      %p55 = por %p53, %p54
      %p56 = scmp.ne.s32.totalorder %s42, %s43
      %p57 = scmp.eq.s32.totalorder %s35, 1
      %p58 = por %p56, %p57
      %p60 = scmp.ne.s32.totalorder %s43, %s59
      %p61 = scmp.eq.s32.totalorder %s35, 0
      %p62 = por %p60, %p61
      %s63 = ssub.s32 %s29, %s36
      %p64 = scmp.eq.s32.totalorder %s63, 0
      %s66 = sadd.s32 %s65, 1
      %s67 = scalar_select %p64, %s65, %s66
      %p70 = pneg %p64
      %p71 = scmp.eq.s32.totalorder %s29, 1
      %p72 = por %p70, %p71
      %p73 = scmp.ne.s32.totalorder %s65, %s68
      %p74 = scmp.eq.s32.totalorder %s29, 0
      %p75 = por %p73, %p74
      %p76 = scmp.ne.s32.totalorder %s65, %s68
      %p77 = scmp.eq.s32.totalorder %s34, 1
      %p78 = por %p76, %p77
      %p79 = scmp.ne.s32.totalorder %s68, %s69
      %p80 = scmp.eq.s32.totalorder %s34, 0
      %p81 = por %p79, %p80
      %p82 = scmp.ne.s32.totalorder %s68, %s69
      %p83 = scmp.eq.s32.totalorder %s35, 1
      %p84 = por %p82, %p83
      %p86 = scmp.ne.s32.totalorder %s69, %s85
      %p87 = scmp.eq.s32.totalorder %s35, 0
      %p88 = por %p86, %p87
      %s90 = sadd.s32 %s89, 1
      %p93 = scmp.eq.s32.totalorder %s29, 1
      %p94 = scmp.ne.s32.totalorder %s89, %s91
      %p95 = scmp.eq.s32.totalorder %s29, 0
      %p96 = por %p94, %p95
      %p97 = scmp.ne.s32.totalorder %s89, %s91
      %p98 = scmp.eq.s32.totalorder %s34, 1
      %p99 = por %p97, %p98
      %p100 = scmp.ne.s32.totalorder %s91, %s92
      %p101 = scmp.eq.s32.totalorder %s34, 0
      %p102 = por %p100, %p101
      %p103 = scmp.ne.s32.totalorder %s91, %s92
      %p104 = scmp.eq.s32.totalorder %s35, 1
      %p105 = por %p103, %p104
      %p107 = scmp.ne.s32.totalorder %s92, %s106
      %p108 = scmp.eq.s32.totalorder %s35, 0
      %p109 = por %p107, %p108
      %s111 = sadd.s32 %s110, 1
      %p114 = scmp.eq.s32.totalorder %s29, 1
      %p115 = scmp.ne.s32.totalorder %s110, %s112
      %p116 = scmp.eq.s32.totalorder %s29, 0
      %p117 = por %p115, %p116
      %p118 = scmp.ne.s32.totalorder %s110, %s112
      %p119 = scmp.eq.s32.totalorder %s34, 1
      %p120 = por %p118, %p119
      %p121 = scmp.ne.s32.totalorder %s112, %s113
      %p122 = scmp.eq.s32.totalorder %s34, 0
      %p123 = por %p121, %p122
      %p124 = scmp.ne.s32.totalorder %s112, %s113
      %p125 = scmp.eq.s32.totalorder %s35, 1
      %p126 = por %p124, %p125
      %p128 = scmp.ne.s32.totalorder %s113, %s127
      %p129 = scmp.eq.s32.totalorder %s35, 0
      %p130 = por %p128, %p129
      %s132 = sadd.s32 %s131, 1
      %p135 = scmp.eq.s32.totalorder %s29, 1
      %p136 = scmp.ne.s32.totalorder %s131, %s133
      %p137 = scmp.eq.s32.totalorder %s29, 0
      %p138 = por %p136, %p137
      %p139 = scmp.ne.s32.totalorder %s131, %s133
      %p140 = scmp.eq.s32.totalorder %s34, 1
      %p141 = por %p139, %p140
      %p142 = scmp.ne.s32.totalorder %s133, %s134
      %p143 = scmp.eq.s32.totalorder %s34, 0
      %p144 = por %p142, %p143
      %p145 = scmp.ne.s32.totalorder %s133, %s134
      %p146 = scmp.eq.s32.totalorder %s35, 1
      %p147 = por %p145, %p146
      %p149 = scmp.ne.s32.totalorder %s134, %s148
      %p150 = scmp.eq.s32.totalorder %s35, 0
      %p151 = por %p149, %p150
      %s153 = sadd.s32 %s152, 1
      %p156 = scmp.eq.s32.totalorder %s29, 1
      %p157 = scmp.ne.s32.totalorder %s152, %s154
      %p158 = scmp.eq.s32.totalorder %s29, 0
      %p159 = por %p157, %p158
      %p160 = scmp.ne.s32.totalorder %s152, %s154
      %p161 = scmp.eq.s32.totalorder %s34, 1
      %p162 = por %p160, %p161
      %p163 = scmp.ne.s32.totalorder %s154, %s155
      %p164 = scmp.eq.s32.totalorder %s34, 0
      %p165 = por %p163, %p164
      %p166 = scmp.ne.s32.totalorder %s154, %s155
      %p167 = scmp.eq.s32.totalorder %s35, 1
      %p168 = por %p166, %p167
      %p170 = scmp.ne.s32.totalorder %s155, %s169
      %p171 = scmp.eq.s32.totalorder %s35, 0
      %p172 = por %p170, %p171
      %s174 = sadd.s32 %s173, 1
      %p177 = scmp.eq.s32.totalorder %s29, 1
      %p178 = scmp.ne.s32.totalorder %s173, %s175
      %p179 = scmp.eq.s32.totalorder %s29, 0
      %p180 = por %p178, %p179
      %p181 = scmp.ne.s32.totalorder %s173, %s175
      %p182 = scmp.eq.s32.totalorder %s34, 1
      %p183 = por %p181, %p182
      %p184 = scmp.ne.s32.totalorder %s175, %s176
      %p185 = scmp.eq.s32.totalorder %s34, 0
      %p186 = por %p184, %p185
      %p187 = scmp.ne.s32.totalorder %s175, %s176
      %p188 = scmp.eq.s32.totalorder %s35, 1
      %p189 = por %p187, %p188
      %p191 = scmp.ne.s32.totalorder %s176, %s190
      %p192 = scmp.eq.s32.totalorder %s35, 0
      %p193 = por %p191, %p192
      %s194 = ssub.s32 %s29, %s36
      %p195 = scmp.eq.s32.totalorder %s194, 0
      %s197 = sadd.s32 %s196, 1
      %s198 = scalar_select %p195, %s196, %s197
      %p201 = pneg %p195
      %p202 = scmp.eq.s32.totalorder %s29, 1
      %p203 = por %p201, %p202
      %p204 = scmp.ne.s32.totalorder %s196, %s199
      %p205 = scmp.eq.s32.totalorder %s29, 0
      %p206 = por %p204, %p205
      %p207 = scmp.ne.s32.totalorder %s196, %s199
      %p208 = scmp.eq.s32.totalorder %s34, 1
      %p209 = por %p207, %p208
      %p210 = scmp.ne.s32.totalorder %s199, %s200
      %p211 = scmp.eq.s32.totalorder %s34, 0
      %p212 = por %p210, %p211
      %p213 = scmp.ne.s32.totalorder %s199, %s200
      %p214 = scmp.eq.s32.totalorder %s35, 1
      %p215 = por %p213, %p214
      %p217 = scmp.ne.s32.totalorder %s200, %s216
      %p218 = scmp.eq.s32.totalorder %s35, 0
      %p219 = por %p217, %p218
      %s220 = ssub.s32 %s29, %s36
      %p221 = scmp.eq.s32.totalorder %s220, 0
      %s223 = sadd.s32 %s222, 1
      %s224 = scalar_select %p221, %s222, %s223
      %p227 = pneg %p221
      %p228 = scmp.eq.s32.totalorder %s29, 1
      %p229 = por %p227, %p228
      %p230 = scmp.ne.s32.totalorder %s222, %s225
      %p231 = scmp.eq.s32.totalorder %s29, 0
      %p232 = por %p230, %p231
      %p233 = scmp.ne.s32.totalorder %s222, %s225
      %p234 = scmp.eq.s32.totalorder %s34, 1
      %p235 = por %p233, %p234
      %p236 = scmp.ne.s32.totalorder %s225, %s226
      %p237 = scmp.eq.s32.totalorder %s34, 0
      %p238 = por %p236, %p237
      %p239 = scmp.ne.s32.totalorder %s225, %s226
      %p240 = scmp.eq.s32.totalorder %s35, 1
      %p241 = por %p239, %p240
      %p243 = scmp.ne.s32.totalorder %s226, %s242
      %p244 = scmp.eq.s32.totalorder %s35, 0
      %p245 = por %p243, %p244
      %p246 = scmp.le.s32.totalorder 1, %s29
      %p247 = scmp.lt.s32.totalorder %s29, 3
      %p248 = pnand %p246, %p247
      %p249 = pneg %p248
      // Predicated region
      $region9: #{tpu_custom_call.1} parent=5 // pred_check
        _
      $region10: #{tpu_custom_call.1} parent=5 // pred_check_branch
        %251 = sbr.rel (%p248) target = $region12
      $region11: #{tpu_custom_call.1} parent=5 // pred_region
        %s252 = ssub.s32 %s29, 1
        // Predicated region
        $region13: #{tpu_custom_call.1} parent=11 // pred_check
          %p253 = pneg %p102
        $region14: #{tpu_custom_call.1} parent=11 // pred_check_branch
          %255 = sbr.rel (%p253) target = $region16
        $region15: #{tpu_custom_call.1} parent=11 // pred_region
          %s257 = ssub.s32 2048, 2048
          %258 = vsyncadd [#allocation6], %s257
          %s259 = sshll.u32 [#allocation7], 4
          %s260 = int_to_ptr.vmem [resolvable:$true] %s259
          %265 = dma.hbm_to_vmem [thread:$0]  %s2, 2048, %s260, [#allocation6], 128, 128, 8
        $region16: #{tpu_custom_call.1} parent=11 // pred_fallthru
          _
        // Predicated region
        $region17: #{tpu_custom_call.1} parent=11 // pred_check
          %p266 = pneg %p123
        $region18: #{tpu_custom_call.1} parent=11 // pred_check_branch
          %268 = sbr.rel (%p266) target = $region20
        $region19: #{tpu_custom_call.1} parent=11 // pred_region
          %s270 = ssub.s32 2048, 2048
          %271 = vsyncadd [#allocation9], %s270
          %s272 = sshll.u32 [#allocation8], 4
          %s273 = int_to_ptr.vmem [resolvable:$true] %s272
          %278 = dma.hbm_to_vmem [thread:$0]  %s3, 2048, %s273, [#allocation9], 128, 128, 8
        $region20: #{tpu_custom_call.1} parent=11 // pred_fallthru
          _
        // Predicated region
        $region21: #{tpu_custom_call.1} parent=11 // pred_check
          %p279 = pneg %p144
        $region22: #{tpu_custom_call.1} parent=11 // pred_check_branch
          %281 = sbr.rel (%p279) target = $region24
        $region23: #{tpu_custom_call.1} parent=11 // pred_region
          %s283 = ssub.s32 2048, 2048
          %284 = vsyncadd [#allocation9], %s283
          %s285 = sshll.u32 [#allocation10], 4
          %s286 = int_to_ptr.vmem [resolvable:$true] %s285
          %291 = dma.hbm_to_vmem [thread:$0]  %s4, 2048, %s286, [#allocation9], 128, 128, 8
        $region24: #{tpu_custom_call.1} parent=11 // pred_fallthru
          _
        // Predicated region
        $region25: #{tpu_custom_call.1} parent=11 // pred_check
          %p292 = pneg %p165
        $region26: #{tpu_custom_call.1} parent=11 // pred_check_branch
          %294 = sbr.rel (%p292) target = $region28
        $region27: #{tpu_custom_call.1} parent=11 // pred_region
          %s296 = ssub.s32 2048, 2048
          %297 = vsyncadd [#allocation12], %s296
          %s298 = sshll.u32 [#allocation11], 4
          %s299 = int_to_ptr.vmem [resolvable:$true] %s298
          %304 = dma.hbm_to_vmem [thread:$0]  %s5, 2048, %s299, [#allocation12], 128, 128, 8
        $region28: #{tpu_custom_call.1} parent=11 // pred_fallthru
          _
        // Predicated region
        $region29: #{tpu_custom_call.1} parent=11 // pred_check
          %p305 = pneg %p186
        $region30: #{tpu_custom_call.1} parent=11 // pred_check_branch
          %307 = sbr.rel (%p305) target = $region32
        $region31: #{tpu_custom_call.1} parent=11 // pred_region
          _
        $region32: #{tpu_custom_call.1} parent=11 // pred_fallthru
          _
      $region12: #{tpu_custom_call.1} parent=5 // pred_fallthru
        _
      %p308 = scmp.lt.s32.totalorder %s29, 2
      // Predicated region
      $region33: #{tpu_custom_call.1} parent=5 // pred_check
        %p309 = pneg %p308
      $region34: #{tpu_custom_call.1} parent=5 // pred_check_branch
        %311 = sbr.rel (%p309) target = $region36
      $region35: #{tpu_custom_call.1} parent=5 // pred_region
        // Predicated region
        $region37: #{tpu_custom_call.1} parent=35 // pred_check
          %p312 = pneg %p49
        $region38: #{tpu_custom_call.1} parent=35 // pred_check_branch
          %314 = sbr.rel (%p312) target = $region40
        $region39: #{tpu_custom_call.1} parent=35 // pred_region
          %s315 = sand.u32 %s39, 1
          %s316 = scalar_lea.sflag [#allocation3], %s315
          %s317 = sand.u32 %s39, 1
          %s318 = smul.addr %s317, 8
          %s319 = scalar_lea.vmem [#allocation2], %s318
          %s321 = ssub.s32 128, 128
          %322 = vsyncadd %s316, %s321
          %s323 = smul.addr %s29, 128
          %s324 = scalar_lea.hbm %s0, %s323
          %s326 = sshll.u32 %s319, 4
          %s327 = int_to_ptr.vmem [resolvable:$true] %s326
          %329 = dma.hbm_to_vmem [thread:$0]  %s324, 128, %s327, %s316
        $region40: #{tpu_custom_call.1} parent=35 // pred_fallthru
          _
        // Predicated region
        $region41: #{tpu_custom_call.1} parent=35 // pred_check
          %p330 = pneg %p75
        $region42: #{tpu_custom_call.1} parent=35 // pred_check_branch
          %332 = sbr.rel (%p330) target = $region44
        $region43: #{tpu_custom_call.1} parent=35 // pred_region
          %s333 = sand.u32 %s29, 1
          %s334 = scalar_lea.sflag [#allocation6], %s333
          %s335 = sand.u32 %s65, 1
          %s336 = smul.addr %s335, 8
          %s337 = scalar_lea.vmem [#allocation5], %s336
          %s339 = ssub.s32 128, 128
          %340 = vsyncadd %s334, %s339
          %s341 = smul.addr %s29, 128
          %s342 = scalar_lea.hbm %s1, %s341
          %s344 = sshll.u32 %s337, 4
          %s345 = int_to_ptr.vmem [resolvable:$true] %s344
          %347 = dma.hbm_to_vmem [thread:$0]  %s342, 128, %s345, %s334
        $region44: #{tpu_custom_call.1} parent=35 // pred_fallthru
          _
      $region36: #{tpu_custom_call.1} parent=5 // pred_fallthru
        _
      %p348 = scmp.le.s32.totalorder 1, %s29
      %p349 = scmp.lt.s32.totalorder %s29, 3
      %p350 = pnand %p348, %p349
      %p351 = pneg %p350
      // Predicated region
      $region45: #{tpu_custom_call.1} parent=5 // pred_check
        _
      $region46: #{tpu_custom_call.1} parent=5 // pred_check_branch
        %353 = sbr.rel (%p350) target = $region48
      $region47: #{tpu_custom_call.1} parent=5 // pred_region
        %s354 = ssub.s32 %s29, 1
        %s355 = sand.u32 %s42, 1
        %s356 = scalar_lea.sflag [#allocation3], %s355
        %s357 = sand.u32 %s42, 1
        %s358 = smul.addr %s357, 8
        %s359 = scalar_lea.vmem [#allocation2], %s358
        // Predicated region
        $region49: #{tpu_custom_call.1} parent=47 // pred_check
          %p360 = pneg %p55
        $region50: #{tpu_custom_call.1} parent=47 // pred_check_branch
          %362 = sbr.rel (%p360) target = $region52
        $region51: #{tpu_custom_call.1} parent=47 // pred_region
          %363 = dma.done %s356, 128
        $region52: #{tpu_custom_call.1} parent=47 // pred_fallthru
          _
        %s364 = sand.u32 %s34, 1
        %s365 = scalar_lea.sflag [#allocation6], %s364
        %s366 = sand.u32 %s68, 1
        %s367 = smul.addr %s366, 8
        %s368 = scalar_lea.vmem [#allocation5], %s367
        // Predicated region
        $region53: #{tpu_custom_call.1} parent=47 // pred_check
          %p369 = pneg %p81
        $region54: #{tpu_custom_call.1} parent=47 // pred_check_branch
          %371 = sbr.rel (%p369) target = $region56
        $region55: #{tpu_custom_call.1} parent=47 // pred_region
          %372 = dma.done %s365, 128
        $region56: #{tpu_custom_call.1} parent=47 // pred_fallthru
          _
        // Predicated region
        $region57: #{tpu_custom_call.1} parent=47 // pred_check
          %p373 = pneg %p102
        $region58: #{tpu_custom_call.1} parent=47 // pred_check_branch
          %375 = sbr.rel (%p373) target = $region60
        $region59: #{tpu_custom_call.1} parent=47 // pred_region
          %376 = dma.done [#allocation6], 2048
        $region60: #{tpu_custom_call.1} parent=47 // pred_fallthru
          _
        // Predicated region
        $region61: #{tpu_custom_call.1} parent=47 // pred_check
          %p377 = pneg %p123
        $region62: #{tpu_custom_call.1} parent=47 // pred_check_branch
          %379 = sbr.rel (%p377) target = $region64
        $region63: #{tpu_custom_call.1} parent=47 // pred_region
          %380 = dma.done [#allocation9], 2048
        $region64: #{tpu_custom_call.1} parent=47 // pred_fallthru
          _
        // Predicated region
        $region65: #{tpu_custom_call.1} parent=47 // pred_check
          %p381 = pneg %p144
        $region66: #{tpu_custom_call.1} parent=47 // pred_check_branch
          %383 = sbr.rel (%p381) target = $region68
        $region67: #{tpu_custom_call.1} parent=47 // pred_region
          %384 = dma.done [#allocation9], 2048
        $region68: #{tpu_custom_call.1} parent=47 // pred_fallthru
          _
        // Predicated region
        $region69: #{tpu_custom_call.1} parent=47 // pred_check
          %p385 = pneg %p165
        $region70: #{tpu_custom_call.1} parent=47 // pred_check_branch
          %387 = sbr.rel (%p385) target = $region72
        $region71: #{tpu_custom_call.1} parent=47 // pred_region
          %388 = dma.done [#allocation12], 2048
        $region72: #{tpu_custom_call.1} parent=47 // pred_fallthru
          _
        %s389 = sand.u32 %s42, 1
        %s390 = scalar_lea.sflag [#allocation3], %s389
        %s391 = sand.u32 %s42, 1
        %s392 = smul.addr %s391, 8
        %s393 = scalar_lea.vmem [#allocation2], %s392
        %p394 = pneg %p55
        %p395 = pneg %p52
        %s396 = sand.u32 %s34, 1
        %s397 = scalar_lea.sflag [#allocation6], %s396
        %s398 = sand.u32 %s68, 1
        %s399 = smul.addr %s398, 8
        %s400 = scalar_lea.vmem [#allocation5], %s399
        %p401 = pneg %p81
        %p402 = pneg %p78
        %p403 = pneg %p102
        %p404 = pneg %p99
        %p405 = pneg %p123
        %p406 = pneg %p120
        %p407 = pneg %p144
        %p408 = pneg %p141
        %p409 = pneg %p165
        %p410 = pneg %p162
        %p411 = pneg %p186
        %p412 = pneg %p183
        %p413 = pneg %p212
        %p414 = pneg %p209
        %s415 = sand.u32 %s199, 1
        %s416 = scalar_lea.sflag [#allocation4], %s415
        %s417 = sand.u32 %s199, 1
        %s418 = smul.addr %s417, 8
        %s419 = scalar_lea.vmem [#allocation13], %s418
        %p420 = pneg %p238
        %p421 = pneg %p235
        %s422 = sand.u32 %s225, 1
        %s423 = scalar_lea.sflag [#allocation15], %s422
        %s424 = sand.u32 %s225, 1
        %s425 = smul.addr %s424, 8
        %s426 = scalar_lea.vmem [#allocation14], %s425
        %v427 = vld [vmem:[%s359] sm:$0xff]
        %v428 = vld [vmem:[%s368] sm:$0xff]
        %v429 = vld [vmem:[#allocation11] sm:$0xff]
        %v430 = vld [vmem:[#allocation11 + $0x8] sm:$0xff]
        %v431 = vld [vmem:[#allocation11 + $0x10] sm:$0xff]
        %v432 = vld [vmem:[#allocation11 + $0x18] sm:$0xff]
        %v433 = vld [vmem:[#allocation11 + $0x20] sm:$0xff]
        %v434 = vld [vmem:[#allocation11 + $0x28] sm:$0xff]
        %v435 = vld [vmem:[#allocation11 + $0x30] sm:$0xff]
        %v436 = vld [vmem:[#allocation11 + $0x38] sm:$0xff]
        %v437 = vld [vmem:[#allocation11 + $0x40] sm:$0xff]
        %v438 = vld [vmem:[#allocation11 + $0x48] sm:$0xff]
        %v439 = vld [vmem:[#allocation11 + $0x50] sm:$0xff]
        %v440 = vld [vmem:[#allocation11 + $0x58] sm:$0xff]
        %v441 = vld [vmem:[#allocation11 + $0x60] sm:$0xff]
        %v442 = vld [vmem:[#allocation11 + $0x68] sm:$0xff]
        %v443 = vld [vmem:[#allocation11 + $0x70] sm:$0xff]
        %v444 = vld [vmem:[#allocation11 + $0x78] sm:$0xff]
        %v445 = vld [vmem:[%s6] sm:$0x1]
        %v447 = vlaneseq
        %v448 = vshrl.u32 %v447, 7
        %v449 = vsub.s32 0, %v448
        %v450 = vrot.slane %v445, %v449
        %452 = vmatprep.subr.mxu0 0.0
        %453 = vmatpush1.msra.mxu0 %v429
        %454 = vmatprep.subr.mxu0 0.0
        %455 = vmatpush1.msra.mxu0 %v430
        %456 = vmatprep.subr.mxu0 0.0
        %457 = vmatpush1.msra.mxu0 %v431
        %458 = vmatprep.subr.mxu0 0.0
        %459 = vmatpush1.msra.mxu0 %v432
        %460 = vmatprep.subr.mxu0 0.0
        %461 = vmatpush1.msra.mxu0 %v433
        %462 = vmatprep.subr.mxu0 0.0
        %463 = vmatpush1.msra.mxu0 %v434
        %464 = vmatprep.subr.mxu0 0.0
        %465 = vmatpush1.msra.mxu0 %v435
        %466 = vmatprep.subr.mxu0 0.0
        %467 = vmatpush1.msra.mxu0 %v436
        %468 = vmatprep.subr.mxu0 0.0
        %469 = vmatpush1.msra.mxu0 %v437
        %470 = vmatprep.subr.mxu0 0.0
        %471 = vmatpush1.msra.mxu0 %v438
        %472 = vmatprep.subr.mxu0 0.0
        %473 = vmatpush1.msra.mxu0 %v439
        %474 = vmatprep.subr.mxu0 0.0
        %475 = vmatpush1.msra.mxu0 %v440
        %476 = vmatprep.subr.mxu0 0.0
        %477 = vmatpush1.msra.mxu0 %v441
        %478 = vmatprep.subr.mxu0 0.0
        %479 = vmatpush1.msra.mxu0 %v442
        %480 = vmatprep.subr.mxu0 0.0
        %481 = vmatpush1.msra.mxu0 %v443
        %482 = vmatprep.subr.mxu0 0.0
        %483 = vmatpush1.msra.mxu0 %v444
        %484 = vmatprep.subr.mxu0 0.0
        %485 = vmatpush1.msra.mxu0 0.0
        %486 = vmatprep.subr.mxu0 0.0
        %487 = vmatpush1.msra.mxu0 0.0
        %488 = vmatprep.subr.mxu0 0.0
        %489 = vmatpush1.msra.mxu0 0.0
        %490 = vmatprep.subr.mxu0 0.0
        %491 = vmatpush1.msra.mxu0 0.0
        %492 = vmatprep.subr.mxu0 0.0
        %493 = vmatpush1.msra.mxu0 0.0
        %494 = vmatprep.subr.mxu0 0.0
        %495 = vmatpush1.msra.mxu0 0.0
        %496 = vmatprep.subr.mxu0 0.0
        %497 = vmatpush1.msra.mxu0 0.0
        %498 = vmatprep.subr.mxu0 0.0
        %499 = vmatpush1.msra.mxu0 0.0
        %500 = vmatprep.subr.mxu0 0.0
        %501 = vmatpush1.msra.mxu0 0.0
        %502 = vmatprep.subr.mxu0 0.0
        %503 = vmatpush1.msra.mxu0 0.0
        %504 = vmatprep.subr.mxu0 0.0
        %505 = vmatpush1.msra.mxu0 0.0
        %506 = vmatprep.subr.mxu0 0.0
        %507 = vmatpush1.msra.mxu0 0.0
        %508 = vmatprep.subr.mxu0 0.0
        %509 = vmatpush1.msra.mxu0 0.0
        %510 = vmatprep.subr.mxu0 0.0
        %511 = vmatpush1.msra.mxu0 0.0
        %512 = vmatprep.subr.mxu0 0.0
        %513 = vmatpush1.msra.mxu0 0.0
        %514 = vmatprep.subr.mxu0 0.0
        %515 = vmatpush1.msra.mxu0 0.0
        %516 = vmatprep.mubr.f32.mxu0 0.0
        %517 = vmatmul.mubr.f32.gmra.mrb[0].mxu0 %v427
        %v518 = vpop.f32.mrb[0].mxu0
        %v519 = vadd.f32 %v450, %v518
        %v520 = vpop.f32.mrb[0].mxu0
        %521 = vdwg.mxu0
        %v522 = vld [vmem:[#allocation8] sm:$0xff]
        %v523 = vld [vmem:[#allocation8 + $0x8] sm:$0xff]
        %v524 = vld [vmem:[#allocation8 + $0x10] sm:$0xff]
        %v525 = vld [vmem:[#allocation8 + $0x18] sm:$0xff]
        %v526 = vld [vmem:[#allocation8 + $0x20] sm:$0xff]
        %v527 = vld [vmem:[#allocation8 + $0x28] sm:$0xff]
        %v528 = vld [vmem:[#allocation8 + $0x30] sm:$0xff]
        %v529 = vld [vmem:[#allocation8 + $0x38] sm:$0xff]
        %v530 = vld [vmem:[#allocation8 + $0x40] sm:$0xff]
        %v531 = vld [vmem:[#allocation8 + $0x48] sm:$0xff]
        %v532 = vld [vmem:[#allocation8 + $0x50] sm:$0xff]
        %v533 = vld [vmem:[#allocation8 + $0x58] sm:$0xff]
        %v534 = vld [vmem:[#allocation8 + $0x60] sm:$0xff]
        %v535 = vld [vmem:[#allocation8 + $0x68] sm:$0xff]
        %v536 = vld [vmem:[#allocation8 + $0x70] sm:$0xff]
        %v537 = vld [vmem:[#allocation8 + $0x78] sm:$0xff]
        %538 = vmatprep.subr.mxu0 0.0
        %539 = vmatpush1.msra.mxu0 %v522
        %540 = vmatprep.subr.mxu0 0.0
        %541 = vmatpush1.msra.mxu0 %v523
        %542 = vmatprep.subr.mxu0 0.0
        %543 = vmatpush1.msra.mxu0 %v524
        %544 = vmatprep.subr.mxu0 0.0
        %545 = vmatpush1.msra.mxu0 %v525
        %546 = vmatprep.subr.mxu0 0.0
        %547 = vmatpush1.msra.mxu0 %v526
        %548 = vmatprep.subr.mxu0 0.0
        %549 = vmatpush1.msra.mxu0 %v527
        %550 = vmatprep.subr.mxu0 0.0
        %551 = vmatpush1.msra.mxu0 %v528
        %552 = vmatprep.subr.mxu0 0.0
        %553 = vmatpush1.msra.mxu0 %v529
        %554 = vmatprep.subr.mxu0 0.0
        %555 = vmatpush1.msra.mxu0 %v530
        %556 = vmatprep.subr.mxu0 0.0
        %557 = vmatpush1.msra.mxu0 %v531
        %558 = vmatprep.subr.mxu0 0.0
        %559 = vmatpush1.msra.mxu0 %v532
        %560 = vmatprep.subr.mxu0 0.0
        %561 = vmatpush1.msra.mxu0 %v533
        %562 = vmatprep.subr.mxu0 0.0
        %563 = vmatpush1.msra.mxu0 %v534
        %564 = vmatprep.subr.mxu0 0.0
        %565 = vmatpush1.msra.mxu0 %v535
        %566 = vmatprep.subr.mxu0 0.0
        %567 = vmatpush1.msra.mxu0 %v536
        %568 = vmatprep.subr.mxu0 0.0
        %569 = vmatpush1.msra.mxu0 %v537
        %570 = vmatprep.subr.mxu0 0.0
        %571 = vmatpush1.msra.mxu0 0.0
        %572 = vmatprep.subr.mxu0 0.0
        %573 = vmatpush1.msra.mxu0 0.0
        %574 = vmatprep.subr.mxu0 0.0
        %575 = vmatpush1.msra.mxu0 0.0
        %576 = vmatprep.subr.mxu0 0.0
        %577 = vmatpush1.msra.mxu0 0.0
        %578 = vmatprep.subr.mxu0 0.0
        %579 = vmatpush1.msra.mxu0 0.0
        %580 = vmatprep.subr.mxu0 0.0
        %581 = vmatpush1.msra.mxu0 0.0
        %582 = vmatprep.subr.mxu0 0.0
        %583 = vmatpush1.msra.mxu0 0.0
        %584 = vmatprep.subr.mxu0 0.0
        %585 = vmatpush1.msra.mxu0 0.0
        %586 = vmatprep.subr.mxu0 0.0
        %587 = vmatpush1.msra.mxu0 0.0
        %588 = vmatprep.subr.mxu0 0.0
        %589 = vmatpush1.msra.mxu0 0.0
        %590 = vmatprep.subr.mxu0 0.0
        %591 = vmatpush1.msra.mxu0 0.0
        %592 = vmatprep.subr.mxu0 0.0
        %593 = vmatpush1.msra.mxu0 0.0
        %594 = vmatprep.subr.mxu0 0.0
        %595 = vmatpush1.msra.mxu0 0.0
        %596 = vmatprep.subr.mxu0 0.0
        %597 = vmatpush1.msra.mxu0 0.0
        %598 = vmatprep.subr.mxu0 0.0
        %599 = vmatpush1.msra.mxu0 0.0
        %600 = vmatprep.subr.mxu0 0.0
        %601 = vmatpush1.msra.mxu0 0.0
        %602 = vmatprep.mubr.f32.mxu0 0.0
        %603 = vmatmul.mubr.f32.gmra.mrb[0].mxu0 %v519
        %v604 = vpop.f32.mrb[0].mxu0
        %v605 = vadd.f32 0.0, %v604
        %v606 = vpop.f32.mrb[0].mxu0
        %607 = vdwg.mxu0
        %v608 = vlaneseq
        %v609 = vand.u32 %v608, 127
        %vm610 = vcmp.lt.s32.totalorder %v609, 16
        %v611 = vsel %vm610, %v605, -1e+30
        %612 = vmax.xlane.f32.xlu0 %v611
        %v613 = vpop.xlane.xlu0 %612
        %v614 = vsub.f32 %v611, %v613
        %v615 = vmul.f32 %v614, 1.442695
        %v616 = vpow.pop %v615
        %617 = vadd.xlane.f32.xlu0 %v616
        %v618 = vpop.xlane.xlu0 %617
        %v619 = vrcp.pop %v618
        %v620 = vmul.f32 %v616, %v619
        %v621 = vld [vmem:[#allocation7] sm:$0xff]
        %v622 = vld [vmem:[#allocation7 + $0x8] sm:$0xff]
        %v623 = vld [vmem:[#allocation7 + $0x10] sm:$0xff]
        %v624 = vld [vmem:[#allocation7 + $0x18] sm:$0xff]
        %v625 = vld [vmem:[#allocation7 + $0x20] sm:$0xff]
        %v626 = vld [vmem:[#allocation7 + $0x28] sm:$0xff]
        %v627 = vld [vmem:[#allocation7 + $0x30] sm:$0xff]
        %v628 = vld [vmem:[#allocation7 + $0x38] sm:$0xff]
        %v629 = vld [vmem:[#allocation7 + $0x40] sm:$0xff]
        %v630 = vld [vmem:[#allocation7 + $0x48] sm:$0xff]
        %v631 = vld [vmem:[#allocation7 + $0x50] sm:$0xff]
        %v632 = vld [vmem:[#allocation7 + $0x58] sm:$0xff]
        %v633 = vld [vmem:[#allocation7 + $0x60] sm:$0xff]
        %v634 = vld [vmem:[#allocation7 + $0x68] sm:$0xff]
        %v635 = vld [vmem:[#allocation7 + $0x70] sm:$0xff]
        %v636 = vld [vmem:[#allocation7 + $0x78] sm:$0xff]
        %637 = vmatprep.subr.mxu0 0.0
        %638 = vmatpush1.msra.mxu0 %v621
        %639 = vmatprep.subr.mxu0 0.0
        %640 = vmatpush1.msra.mxu0 %v622
        %641 = vmatprep.subr.mxu0 0.0
        %642 = vmatpush1.msra.mxu0 %v623
        %643 = vmatprep.subr.mxu0 0.0
        %644 = vmatpush1.msra.mxu0 %v624
        %645 = vmatprep.subr.mxu0 0.0
        %646 = vmatpush1.msra.mxu0 %v625
        %647 = vmatprep.subr.mxu0 0.0
        %648 = vmatpush1.msra.mxu0 %v626
        %649 = vmatprep.subr.mxu0 0.0
        %650 = vmatpush1.msra.mxu0 %v627
        %651 = vmatprep.subr.mxu0 0.0
        %652 = vmatpush1.msra.mxu0 %v628
        %653 = vmatprep.subr.mxu0 0.0
        %654 = vmatpush1.msra.mxu0 %v629
        %655 = vmatprep.subr.mxu0 0.0
        %656 = vmatpush1.msra.mxu0 %v630
        %657 = vmatprep.subr.mxu0 0.0
        %658 = vmatpush1.msra.mxu0 %v631
        %659 = vmatprep.subr.mxu0 0.0
        %660 = vmatpush1.msra.mxu0 %v632
        %661 = vmatprep.subr.mxu0 0.0
        %662 = vmatpush1.msra.mxu0 %v633
        %663 = vmatprep.subr.mxu0 0.0
        %664 = vmatpush1.msra.mxu0 %v634
        %665 = vmatprep.subr.mxu0 0.0
        %666 = vmatpush1.msra.mxu0 %v635
        %667 = vmatprep.subr.mxu0 0.0
        %668 = vmatpush1.msra.mxu0 %v636
        %669 = vmatprep.subr.mxu0 0.0
        %670 = vmatpush1.msra.mxu0 0.0
        %671 = vmatprep.subr.mxu0 0.0
        %672 = vmatpush1.msra.mxu0 0.0
        %673 = vmatprep.subr.mxu0 0.0
        %674 = vmatpush1.msra.mxu0 0.0
        %675 = vmatprep.subr.mxu0 0.0
        %676 = vmatpush1.msra.mxu0 0.0
        %677 = vmatprep.subr.mxu0 0.0
        %678 = vmatpush1.msra.mxu0 0.0
        %679 = vmatprep.subr.mxu0 0.0
        %680 = vmatpush1.msra.mxu0 0.0
        %681 = vmatprep.subr.mxu0 0.0
        %682 = vmatpush1.msra.mxu0 0.0
        %683 = vmatprep.subr.mxu0 0.0
        %684 = vmatpush1.msra.mxu0 0.0
        %685 = vmatprep.subr.mxu0 0.0
        %686 = vmatpush1.msra.mxu0 0.0
        %687 = vmatprep.subr.mxu0 0.0
        %688 = vmatpush1.msra.mxu0 0.0
        %689 = vmatprep.subr.mxu0 0.0
        %690 = vmatpush1.msra.mxu0 0.0
        %691 = vmatprep.subr.mxu0 0.0
        %692 = vmatpush1.msra.mxu0 0.0
        %693 = vmatprep.subr.mxu0 0.0
        %694 = vmatpush1.msra.mxu0 0.0
        %695 = vmatprep.subr.mxu0 0.0
        %696 = vmatpush1.msra.mxu0 0.0
        %697 = vmatprep.subr.mxu0 0.0
        %698 = vmatpush1.msra.mxu0 0.0
        %699 = vmatprep.subr.mxu0 0.0
        %700 = vmatpush1.msra.mxu0 0.0
        %701 = vmatprep.mubr.f32.mxu0 0.0
        %702 = vmatmul.mubr.f32.gmra.mrb[0].mxu0 %v620
        %v703 = vpop.f32.mrb[0].mxu0
        %v704 = vadd.f32 0.0, %v703
        %v705 = vpop.f32.mrb[0].mxu0
        %706 = vdwg.mxu0
        %708 = vset.pattern.permute.xlu0 127
        %709 = vperm.xlu0 %708, %v428
        %v710 = vpop.permute.xlu0 %709
        %v712 = vmul.f32 %v710, %v427
        %v713 = vsub.f32 1.0, %v428
        %715 = vset.pattern.permute.xlu0 127
        %716 = vperm.xlu0 %715, %v713
        %v717 = vpop.permute.xlu0 %716
        %v719 = vmul.f32 %v717, %v704
        %v720 = vadd.f32 %v712, %v719
        %721 = vst [vmem:[%s419] sm:$0xff] %v720
        %v722 = vld [vmem:[#allocation10] sm:$0xff]
        %v723 = vld [vmem:[#allocation10 + $0x8] sm:$0xff]
        %v724 = vld [vmem:[#allocation10 + $0x10] sm:$0xff]
        %v725 = vld [vmem:[#allocation10 + $0x18] sm:$0xff]
        %v726 = vld [vmem:[#allocation10 + $0x20] sm:$0xff]
        %v727 = vld [vmem:[#allocation10 + $0x28] sm:$0xff]
        %v728 = vld [vmem:[#allocation10 + $0x30] sm:$0xff]
        %v729 = vld [vmem:[#allocation10 + $0x38] sm:$0xff]
        %v730 = vld [vmem:[#allocation10 + $0x40] sm:$0xff]
        %v731 = vld [vmem:[#allocation10 + $0x48] sm:$0xff]
        %v732 = vld [vmem:[#allocation10 + $0x50] sm:$0xff]
        %v733 = vld [vmem:[#allocation10 + $0x58] sm:$0xff]
        %v734 = vld [vmem:[#allocation10 + $0x60] sm:$0xff]
        %v735 = vld [vmem:[#allocation10 + $0x68] sm:$0xff]
        %v736 = vld [vmem:[#allocation10 + $0x70] sm:$0xff]
        %v737 = vld [vmem:[#allocation10 + $0x78] sm:$0xff]
        %738 = vmatprep.subr.mxu0 0.0
        %739 = vmatpush1.msra.mxu0 %v722
        %740 = vmatprep.subr.mxu0 0.0
        %741 = vmatpush1.msra.mxu0 %v723
        %742 = vmatprep.subr.mxu0 0.0
        %743 = vmatpush1.msra.mxu0 %v724
        %744 = vmatprep.subr.mxu0 0.0
        %745 = vmatpush1.msra.mxu0 %v725
        %746 = vmatprep.subr.mxu0 0.0
        %747 = vmatpush1.msra.mxu0 %v726
        %748 = vmatprep.subr.mxu0 0.0
        %749 = vmatpush1.msra.mxu0 %v727
        %750 = vmatprep.subr.mxu0 0.0
        %751 = vmatpush1.msra.mxu0 %v728
        %752 = vmatprep.subr.mxu0 0.0
        %753 = vmatpush1.msra.mxu0 %v729
        %754 = vmatprep.subr.mxu0 0.0
        %755 = vmatpush1.msra.mxu0 %v730
        %756 = vmatprep.subr.mxu0 0.0
        %757 = vmatpush1.msra.mxu0 %v731
        %758 = vmatprep.subr.mxu0 0.0
        %759 = vmatpush1.msra.mxu0 %v732
        %760 = vmatprep.subr.mxu0 0.0
        %761 = vmatpush1.msra.mxu0 %v733
        %762 = vmatprep.subr.mxu0 0.0
        %763 = vmatpush1.msra.mxu0 %v734
        %764 = vmatprep.subr.mxu0 0.0
        %765 = vmatpush1.msra.mxu0 %v735
        %766 = vmatprep.subr.mxu0 0.0
        %767 = vmatpush1.msra.mxu0 %v736
        %768 = vmatprep.subr.mxu0 0.0
        %769 = vmatpush1.msra.mxu0 %v737
        %770 = vmatprep.subr.mxu0 0.0
        %771 = vmatpush1.msra.mxu0 0.0
        %772 = vmatprep.subr.mxu0 0.0
        %773 = vmatpush1.msra.mxu0 0.0
        %774 = vmatprep.subr.mxu0 0.0
        %775 = vmatpush1.msra.mxu0 0.0
        %776 = vmatprep.subr.mxu0 0.0
        %777 = vmatpush1.msra.mxu0 0.0
        %778 = vmatprep.subr.mxu0 0.0
        %779 = vmatpush1.msra.mxu0 0.0
        %780 = vmatprep.subr.mxu0 0.0
        %781 = vmatpush1.msra.mxu0 0.0
        %782 = vmatprep.subr.mxu0 0.0
        %783 = vmatpush1.msra.mxu0 0.0
        %784 = vmatprep.subr.mxu0 0.0
        %785 = vmatpush1.msra.mxu0 0.0
        %786 = vmatprep.subr.mxu0 0.0
        %787 = vmatpush1.msra.mxu0 0.0
        %788 = vmatprep.subr.mxu0 0.0
        %789 = vmatpush1.msra.mxu0 0.0
        %790 = vmatprep.subr.mxu0 0.0
        %791 = vmatpush1.msra.mxu0 0.0
        %792 = vmatprep.subr.mxu0 0.0
        %793 = vmatpush1.msra.mxu0 0.0
        %794 = vmatprep.subr.mxu0 0.0
        %795 = vmatpush1.msra.mxu0 0.0
        %796 = vmatprep.subr.mxu0 0.0
        %797 = vmatpush1.msra.mxu0 0.0
        %798 = vmatprep.subr.mxu0 0.0
        %799 = vmatpush1.msra.mxu0 0.0
        %800 = vmatprep.subr.mxu0 0.0
        %801 = vmatpush1.msra.mxu0 0.0
        %802 = vmatprep.mubr.f32.mxu0 0.0
        %803 = vmatmul.mubr.f32.gmra.mrb[0].mxu0 %v620
        %v804 = vpop.f32.mrb[0].mxu0
        %v805 = vadd.f32 0.0, %v804
        %v806 = vpop.f32.mrb[0].mxu0
        %807 = vdwg.mxu0
        %v808 = vmul.f32 %v710, %v428
        %v809 = vmul.f32 %v717, %v805
        %v810 = vadd.f32 %v808, %v809
        %811 = vst [vmem:[%s426] sm:$0xff] %v810
        %s812 = sand.u32 %s199, 1
        %s813 = scalar_lea.sflag [#allocation4], %s812
        %s814 = sand.u32 %s199, 1
        %s815 = smul.addr %s814, 8
        %s816 = scalar_lea.vmem [#allocation13], %s815
        %s817 = sand.u32 %s225, 1
        %s818 = scalar_lea.sflag [#allocation15], %s817
        %s819 = sand.u32 %s225, 1
        %s820 = smul.addr %s819, 8
        %s821 = scalar_lea.vmem [#allocation14], %s820
        // Predicated region
        $region73: #{tpu_custom_call.1} parent=47 // pred_check
          %p822 = pneg %p209
        $region74: #{tpu_custom_call.1} parent=47 // pred_check_branch
          %824 = sbr.rel (%p822) target = $region76
        $region75: #{tpu_custom_call.1} parent=47 // pred_region
          %s826 = ssub.s32 128, 128
          %827 = vsyncadd %s813, %s826
          %s828 = smul.addr %s34, 128
          %s829 = scalar_lea.hbm %s7, %s828
          %s831 = sshll.u32 %s816, 4
          %s832 = int_to_ptr.vmem [resolvable:$true] %s831
          %834 = dma.vmem_to_hbm [thread:$0]  %s832, 128, %s829, %s813
        $region76: #{tpu_custom_call.1} parent=47 // pred_fallthru
          _
        // Predicated region
        $region77: #{tpu_custom_call.1} parent=47 // pred_check
          %p835 = pneg %p235
        $region78: #{tpu_custom_call.1} parent=47 // pred_check_branch
          %837 = sbr.rel (%p835) target = $region80
        $region79: #{tpu_custom_call.1} parent=47 // pred_region
          %s839 = ssub.s32 128, 128
          %840 = vsyncadd %s818, %s839
          %s841 = smul.addr %s34, 128
          %s842 = scalar_lea.hbm %s8, %s841
          %s844 = sshll.u32 %s821, 4
          %s845 = int_to_ptr.vmem [resolvable:$true] %s844
          %847 = dma.vmem_to_hbm [thread:$0]  %s845, 128, %s842, %s818
        $region80: #{tpu_custom_call.1} parent=47 // pred_fallthru
          _
      $region48: #{tpu_custom_call.1} parent=5 // pred_fallthru
        _
      %p848 = scmp.le.s32.totalorder 2, %s29
      // Predicated region
      $region81: #{tpu_custom_call.1} parent=5 // pred_check
        %p849 = pneg %p848
      $region82: #{tpu_custom_call.1} parent=5 // pred_check_branch
        %851 = sbr.rel (%p849) target = $region84
      $region83: #{tpu_custom_call.1} parent=5 // pred_region
        %s852 = ssub.s32 %s29, 2
        // Predicated region
        $region85: #{tpu_custom_call.1} parent=83 // pred_check
          %p853 = pneg %p215
        $region86: #{tpu_custom_call.1} parent=83 // pred_check_branch
          %855 = sbr.rel (%p853) target = $region88
        $region87: #{tpu_custom_call.1} parent=83 // pred_region
          %s856 = sand.u32 %s200, 1
          %s857 = scalar_lea.sflag [#allocation4], %s856
          %s858 = sand.u32 %s200, 1
          %s859 = smul.addr %s858, 8
          %s860 = scalar_lea.vmem [#allocation13], %s859
          %861 = dma.done %s857, 128
        $region88: #{tpu_custom_call.1} parent=83 // pred_fallthru
          _
        // Predicated region
        $region89: #{tpu_custom_call.1} parent=83 // pred_check
          %p862 = pneg %p241
        $region90: #{tpu_custom_call.1} parent=83 // pred_check_branch
          %864 = sbr.rel (%p862) target = $region92
        $region91: #{tpu_custom_call.1} parent=83 // pred_region
          %s865 = sand.u32 %s226, 1
          %s866 = scalar_lea.sflag [#allocation15], %s865
          %s867 = sand.u32 %s226, 1
          %s868 = smul.addr %s867, 8
          %s869 = scalar_lea.vmem [#allocation14], %s868
          %870 = dma.done %s866, 128
        $region92: #{tpu_custom_call.1} parent=83 // pred_fallthru
          _
      $region84: #{tpu_custom_call.1} parent=5 // pred_fallthru
        _
    $region6: #{tpu_custom_call.1} parent=1 // loop_footer
      %s33 = sadd.s32 1, %s29
    $region7: #{tpu_custom_call.1} parent=1 // loop_footer_branch
      %28 = sbr.rel target = $region3
    $region8: #{tpu_custom_call.1} parent=1 // loop_exit
      _
    %871 = vsyncpa [#allocation3], 1
    %s872 = scalar_lea.sflag [#allocation3], 1
    %873 = vsyncpa %s872, 1
    %874 = vsyncpa [#allocation6], 1
    %s875 = scalar_lea.sflag [#allocation6], 1
    %876 = vsyncpa %s875, 1
    %877 = vsyncpa [#allocation9], 1
    %878 = vsyncpa [#allocation12], 1
    %879 = vsyncpa [#allocation4], 1
    %s880 = scalar_lea.sflag [#allocation4], 1
    %881 = vsyncpa %s880, 1
    %882 = vsyncpa [#allocation15], 1
    %s883 = scalar_lea.sflag [#allocation15], 1
    %884 = vsyncpa %s883, 1

</llo_original>
